<compile_context>
chip_gen: v5e
topology: v5e:2x2
jax: 0.10.0
libtpu: 0.0.40
codegen_flags: <defaults>
</compile_context>

<pallas_src>
import functools
import math

import jax
import jax.numpy as jnp
from jax.experimental import pallas as pl
from jax.experimental.pallas import tpu as pltpu


def _gl_kernel(x_ref, w_ref, b_ref, o_ref):
    # x_ref: (1, 1, Ck, tn)  w_ref: (1, Ok, Ck)  b_ref: (1, Ok, 1)  o_ref: (1, 1, Ok, tn)
    y = jnp.dot(w_ref[0], x_ref[0, 0], preferred_element_type=jnp.float32)
    o_ref[0, 0] = (y + b_ref[0]).astype(o_ref.dtype)


def _round_up(x, m):
    return (x + m - 1) // m * m


def _vmem_limit_bytes():
    """Scoped-VMEM limit derived from the actual part (v5e/v6e: 128 MiB,
    v7x: 64 MiB per TC); keep ~25% headroom for Mosaic internal scratch."""
    cap = 64 << 20  # conservative fallback == v7x per-TC VMEM
    try:
        info = pltpu.get_tpu_info()
        cap = int(getattr(info, "vmem_capacity_bytes", cap)) or cap
    except Exception:
        pass
    return int(cap * 3 // 4)


def _pick_tile(hw, ck, ok, gk, batch, itemsize, vmem_limit, cap=32768):
    """Largest lane-dense HW tile that fits VMEM after accounting for the
    resident weight/bias (counted x2 in case Mosaic double-buffers the
    constant-index blocks)."""
    resident = 2 * (ok * ck + ok) * itemsize
    budget = max(vmem_limit - resident - (2 << 20), 1 << 20)
    per_col = 2 * (ck + ok) * itemsize  # double-buffered x and out tiles, per HW column
    tn = (budget // per_col) // 128 * 128
    tn = max(128, min(tn, cap))
    # v7x has 2 TensorCores: if HW is the only non-trivial grid axis, keep >=2 tiles.
    if batch * gk == 1 and hw > 128:
        tn = min(tn, max(128, _round_up(-(-hw // 2), 128)))
    if tn >= hw:
        tn = hw  # single full-extent tile: block dim == array dim, no padding at all
    return tn


def _grouped_linear_pallas(x4, w, b, *, tn, flops, vmem_limit):
    """x4: (B, Gk, Ck, HW), w: (Gk, Ok, Ck), b: (Gk, Ok, 1) -> (B, Gk, Ok, HW)."""
    B, Gk, Ck, HW = x4.shape
    Ok = w.shape[1]
    nt = pl.cdiv(HW, tn)  # ragged last tile handled by Pallas (masked writes)
    grid = (Gk, B, nt)    # group outermost so each group's weight is fetched once
    itemsize = jnp.dtype(x4.dtype).itemsize
    cost = pl.CostEstimate(
        flops=flops,  # useful FLOPs only (no block-diagonal zero blocks counted)
        transcendentals=0,
        bytes_accessed=(B * Gk * Ck * HW + Gk * Ok * Ck + Gk * Ok + B * Gk * Ok * HW)
        * itemsize,
    )
    return pl.pallas_call(
        _gl_kernel,
        out_shape=jax.ShapeDtypeStruct((B, Gk, Ok, HW), x4.dtype),
        grid_spec=pltpu.PrefetchScalarGridSpec(
            num_scalar_prefetch=0,
            grid=grid,
            in_specs=[
                pl.BlockSpec((1, 1, Ck, tn), lambda gi, bi, ni: (bi, gi, 0, ni)),
                pl.BlockSpec((1, Ok, Ck), lambda gi, bi, ni: (gi, 0, 0)),
                pl.BlockSpec((1, Ok, 1), lambda gi, bi, ni: (gi, 0, 0)),
            ],
            out_specs=pl.BlockSpec((1, 1, Ok, tn), lambda gi, bi, ni: (bi, gi, 0, ni)),
        ),
        compiler_params=pltpu.CompilerParams(
            dimension_semantics=("parallel", "parallel", "parallel"),
            vmem_limit_bytes=vmem_limit,
        ),
        cost_estimate=cost,
    )(x4, w, b)


def gl_projector_forward(x, weights, biases, groups):
    """x: (B, C, H, W) NCHW.  weights: (G, Co_g, Ci_g) (1x1-conv kernels squeezed).
    biases: (G, Co_g).  Returns (B, G*Co_g, H, W) — same as torch.cat(outs, dim=1)."""
    B, C, H, W = x.shape
    G = groups
    # Mirror F.pad(x, (0,0,0,0,0,pad)) — zero-pad channels up to a multiple of groups.
    if C % G != 0:
        pad = G - C % G
        x = jnp.pad(x, ((0, 0), (0, pad), (0, 0), (0, 0)))
        C = C + pad
    Cg = C // G
    Co, Ci = weights.shape[1], weights.shape[2]
    assert Cg == Ci, "per-group channel count must match conv weight (as in PyTorch)"
    Oc = G * Co
    HW = H * W
    itemsize = jnp.dtype(x.dtype).itemsize

    # Per-group blocks when channels are MXU-sized or the fused weight would be
    # large; otherwise fuse all groups into one block-diagonal matmul.
    fused_w_bytes = Oc * C * itemsize
    use_group_axis = G > 1 and ((Ci >= 128 and Co >= 128) or fused_w_bytes > (8 << 20))

    if use_group_axis:
        x4 = x.reshape(B, G, Ci, HW)                       # free reshape, no transpose
        w_k = weights.astype(x.dtype)                      # (G, Co, Ci)
        b_k = biases.reshape(G, Co, 1).astype(x.dtype)
        Gk, Ck, Ok = G, Ci, Co
    else:
        # Fused block-diagonal weight (Oc, C): group g's (Co, Ci) block on the
        # diagonal.  Row order is group-major, matching torch.cat(outs, dim=1).
        idx = jnp.arange(G)
        w_k = (
            jnp.zeros((G, Co, G, Ci), weights.dtype)
            .at[idx, :, idx, :]
            .set(weights)
            .reshape(1, Oc, C)
            .astype(x.dtype)
        )
        x4 = x.reshape(B, 1, C, HW)                        # free reshape
        b_k = biases.reshape(1, Oc, 1).astype(x.dtype)
        Gk, Ck, Ok = 1, C, Oc

    vmem_limit = _vmem_limit_bytes()
    tn = _pick_tile(HW, Ck, Ok, Gk, B, itemsize, vmem_limit)
    useful_flops = 2 * B * HW * G * Co * Ci

    y4 = _grouped_linear_pallas(x4, w_k, b_k, tn=tn, flops=useful_flops,
                                vmem_limit=vmem_limit)

    # (B, Gk, Ok, HW) -> (B, Oc, H, W): free reshape, channel order == torch.cat.
    return y4.reshape(B, Oc, H, W)


def _reference(x, weights, biases, groups):
    """Pure-JAX reference replicating the PyTorch forward."""
    B, C, H, W = x.shape
    G = groups
    if C % G != 0:
        pad = G - C % G
        x = jnp.pad(x, ((0, 0), (0, pad), (0, 0), (0, 0)))
        C = C + pad
    Cg = C // G
    Co = weights.shape[1]
    chunks = x.reshape(B, G, Cg, H, W)
    out = jnp.einsum("bgihw,goi->bgohw", chunks, weights) + biases[None, :, :, None, None]
    return out.reshape(B, G * Co, H, W)


if __name__ == "__main__":
    # Module config (in/out channels divisible by groups, as the torch module assumes).
    groups = 8
    in_channels = 32
    out_channels = 64
    B, H, W = 2, 16, 16

    Ci = in_channels // groups
    Co = out_channels // groups

    key = jax.random.PRNGKey(0)
    kx, kw, kb = jax.random.split(key, 3)

    # Deterministic synthetic parameters (shapes match nn.Conv2d(Ci, Co, 1) per group).
    x = jax.random.normal(kx, (B, in_channels, H, W), dtype=jnp.float32)
    bound = 1.0 / math.sqrt(Ci)
    weights = jax.random.uniform(kw, (groups, Co, Ci), jnp.float32, -bound, bound)
    biases = jax.random.uniform(kb, (groups, Co), jnp.float32, -bound, bound)

    fwd = jax.jit(functools.partial(gl_projector_forward, groups=groups))
    out = jax.block_until_ready(fwd(x, weights, biases))

    ref = _reference(x, weights, biases, groups)
    assert out.shape == (B, out_channels, H, W), out.shape
    assert jnp.allclose(out, ref, atol=1e-5, rtol=1e-5), "mismatch vs reference"

    print("KERNEL_OK")
</pallas_src>

<mosaic_0001>
module attributes {stable_mosaic.version = 11 : i64} {
  func.func @_gl_kernel(%arg0: i32, %arg1: i32, %arg2: i32, %arg3: memref<1x1x32x256xf32, #tpu.memory_space<vmem>>, %arg4: memref<1x64x32xf32, #tpu.memory_space<vmem>>, %arg5: memref<1x64x1xf32, #tpu.memory_space<vmem>>, %arg6: memref<1x1x64x256xf32, #tpu.memory_space<vmem>>) attributes {dimension_semantics = [#tpu.dimension_semantics<parallel>, #tpu.dimension_semantics<parallel>, #tpu.dimension_semantics<parallel>], iteration_bounds = array<i64: 1, 2, 1>, scalar_prefetch = 0 : i64, scratch_operands = 0 : i64, tpu.core_type = #tpu.core_type<tc>, window_params = [{transform_indices = @transform_0, window_bounds = array<i64: 1, 1, 32, 256>}, {transform_indices = @transform_1, window_bounds = array<i64: 1, 64, 32>}, {transform_indices = @transform_2, window_bounds = array<i64: 1, 64, 1>}, {transform_indices = @transform_3, window_bounds = array<i64: 1, 1, 64, 256>}]} {
    %c0 = arith.constant 0 : index
    %c0_0 = arith.constant 0 : index
    %c0_1 = arith.constant 0 : index
    %0 = vector.load %arg4[%c0, %c0_0, %c0_1] : memref<1x64x32xf32, #tpu.memory_space<vmem>>, vector<1x64x32xf32>
    %1 = vector.shape_cast %0 : vector<1x64x32xf32> to vector<64x32xf32>
    %c0_2 = arith.constant 0 : index
    %c0_3 = arith.constant 0 : index
    %c0_4 = arith.constant 0 : index
    %c0_5 = arith.constant 0 : index
    %2 = vector.load %arg3[%c0_2, %c0_3, %c0_4, %c0_5] : memref<1x1x32x256xf32, #tpu.memory_space<vmem>>, vector<1x1x32x256xf32>
    %3 = vector.shape_cast %2 : vector<1x1x32x256xf32> to vector<32x256xf32>
    %cst = arith.constant dense<0.000000e+00> : vector<64x256xf32>
    %4 = tpu.matmul %1, %3, %cst {dimension_numbers = #tpu.dot_dimension_numbers<[1], [0], [0], [1], [0, 0, 1, 1], [], []>} : vector<64x32xf32>, vector<32x256xf32>, vector<64x256xf32> -> vector<64x256xf32>
    %c0_6 = arith.constant 0 : index
    %c0_7 = arith.constant 0 : index
    %c0_8 = arith.constant 0 : index
    %5 = vector.load %arg5[%c0_6, %c0_7, %c0_8] : memref<1x64x1xf32, #tpu.memory_space<vmem>>, vector<1x64x1xf32>
    %6 = vector.shape_cast %5 : vector<1x64x1xf32> to vector<64x1xf32>
    %7 = vector.broadcast %6 : vector<64x1xf32> to vector<64x256xf32>
    %8 = arith.addf %4, %7 : vector<64x256xf32>
    %c0_9 = arith.constant 0 : index
    %c0_10 = arith.constant 0 : index
    %c0_11 = arith.constant 0 : index
    %c0_12 = arith.constant 0 : index
    %9 = vector.load %arg6[%c0_9, %c0_10, %c0_11, %c0_12] : memref<1x1x64x256xf32, #tpu.memory_space<vmem>>, vector<1x1x64x256xf32>
    %10 = vector.shape_cast %9 : vector<1x1x64x256xf32> to vector<64x256xf32>
    %11 = vector.shape_cast %8 : vector<64x256xf32> to vector<1x1x64x256xf32>
    tpu.vector_store %arg6[%c0_9, %c0_10, %c0_11, %c0_12], %11 {strides = array<i32>} : memref<1x1x64x256xf32, #tpu.memory_space<vmem>>, vector<1x1x64x256xf32>,
    return
  }
  func.func @transform_0(%arg0: i32, %arg1: i32, %arg2: i32) -> (i32, i32, i32, i32) {
    %c0_i32 = arith.constant 0 : i32
    %c0_i32_0 = arith.constant 0 : i32
    return %arg1, %arg0, %c0_i32, %arg2 : i32, i32, i32, i32
  }
  func.func @transform_1(%arg0: i32, %arg1: i32, %arg2: i32) -> (i32, i32, i32) {
    %c0_i32 = arith.constant 0 : i32
    %c0_i32_0 = arith.constant 0 : i32
    %c0_i32_1 = arith.constant 0 : i32
    return %arg0, %c0_i32, %c0_i32_0 : i32, i32, i32
  }
  func.func @transform_2(%arg0: i32, %arg1: i32, %arg2: i32) -> (i32, i32, i32) {
    %c0_i32 = arith.constant 0 : i32
    %c0_i32_0 = arith.constant 0 : i32
    %c0_i32_1 = arith.constant 0 : i32
    return %arg0, %c0_i32, %c0_i32_0 : i32, i32, i32
  }
  func.func @transform_3(%arg0: i32, %arg1: i32, %arg2: i32) -> (i32, i32, i32, i32) {
    %c0_i32 = arith.constant 0 : i32
    %c0_i32_0 = arith.constant 0 : i32
    return %arg1, %arg0, %c0_i32, %arg2 : i32, i32, i32, i32
  }
}

</mosaic_0001>

<llo_original>
// kernel: gl_projector_forward.1
$region0: #{gl_projector_forward.1}
  #allocation0 [shape = 'u32[]', space=smem, size = 0x4, offset = 0x4, fixed_abs, tag = 'smem constant byte address 0x4 - core index']
  #allocation1 [shape = 'u32[72,128]{1,0:T(1,128)}', space=vmem, size = 0x9000, scoped, tag = 'internal scratch']
  %s0 = inlined_call_operand.vmem [shape: f32[2,1,32,256], index: 0, kind: input, shape index: {}]
  %s1 = inlined_call_operand.vmem [shape: f32[1,64,32], index: 1, kind: input, shape index: {}]
  %s2 = inlined_call_operand.vmem [shape: f32[1,64,1], index: 2, kind: input, shape index: {}]
  %s3 = inlined_call_operand.vmem [shape: f32[2,1,64,256], index: 3, kind: output, shape index: {}]
  %s4 = sld [smem:[#allocation0]]
  $region45: #{gl_projector_forward.1} parent=0
    _
  %s6 = ssub.s32 1, %s4
  %s7 = scalar_select 0, %s6, %s4
  loop: start=0, step=1, limit=4
  $region2: #{gl_projector_forward.1} parent=0 // loop_pre_header
    _
  $region3: #{gl_projector_forward.1} parent=0 // loop_header
    %s9 = sphi 0, %s13
    %p10 = scmp.ge.s32.totalorder %s9, 4
    %s16 = sphi 0, %s35
    %s17 = sphi 0, %s31
    %s18 = sphi 0, %s27
    %s19 = sphi 0, %s16
    %s20 = sphi 0, %s17
    %s21 = sphi 0, %s18
    %s22 = sphi 0, %s19
    %s23 = sphi 0, %s20
    %s24 = sphi 0, %s21
    %s42 = sphi 0, %s44
    %s45 = sphi 0, %s42
    %s46 = sphi 0, %s45
    %s62 = sphi 0, %s46
    %s68 = sphi 0, %s70
    %s71 = sphi 0, %s68
    %s72 = sphi 0, %s71
    %s88 = sphi 0, %s72
    %s94 = sphi 0, %s96
    %s97 = sphi 0, %s94
    %s98 = sphi 0, %s97
    %s114 = sphi 0, %s98
    %s124 = sphi 0, %s126
    %s127 = sphi 0, %s124
    %s128 = sphi 0, %s127
    %s144 = sphi 0, %s128
  $region4: #{gl_projector_forward.1} parent=0 // loop_header_branch
    %12 = sbr.rel (%p10) target = $region8
  $region5: #{gl_projector_forward.1} parent=0 // loop_body
    %s14 = ssub.s32 %s9, 1
    %s15 = ssub.s32 %s9, 2
    %s25 = sadd.s32 1, %s18
    %p26 = scmp.ge.s32.totalorder %s25, 1
    %s27 = scalar_select %p26, 0, %s25
    %s28 = sadd.s32 1, %s17
    %s29 = scalar_select %p26, %s28, %s17
    %p30 = scmp.ge.s32.totalorder %s29, 2
    %s31 = scalar_select %p30, 0, %s29
    %s32 = sadd.s32 1, %s16
    %s33 = scalar_select %p30, %s32, %s16
    %p34 = scmp.ge.s32.totalorder %s33, 1
    %s35 = scalar_select %p34, 0, %s33
    %s36 = ssub.s32 %s17, %s31
    %s37 = ssub.s32 %s16, %s35
    %s38 = sor.u32 %s36, %s37
    %s39 = ssub.s32 %s18, %s27
    %s40 = sor.u32 %s38, %s39
    %p41 = scmp.eq.s32.totalorder %s40, 0
    %s43 = sadd.s32 %s42, 1
    %s44 = scalar_select %p41, %s42, %s43
    %p47 = pneg %p41
    %p48 = scmp.eq.s32.totalorder %s9, 1
    %p49 = por %p47, %p48
    %p50 = scmp.ne.s32.totalorder %s42, %s45
    %p51 = scmp.eq.s32.totalorder %s9, 0
    %p52 = por %p50, %p51
    %p53 = scmp.ne.s32.totalorder %s42, %s45
    %p54 = scmp.eq.s32.totalorder %s14, 1
    %p55 = por %p53, %p54
    %p56 = scmp.ne.s32.totalorder %s45, %s46
    %p57 = scmp.eq.s32.totalorder %s14, 0
    %p58 = por %p56, %p57
    %p59 = scmp.ne.s32.totalorder %s45, %s46
    %p60 = scmp.eq.s32.totalorder %s15, 1
    %p61 = por %p59, %p60
    %p63 = scmp.ne.s32.totalorder %s46, %s62
    %p64 = scmp.eq.s32.totalorder %s15, 0
    %p65 = por %p63, %p64
    %s66 = ssub.s32 %s16, %s35
    %p67 = scmp.eq.s32.totalorder %s66, 0
    %s69 = sadd.s32 %s68, 1
    %s70 = scalar_select %p67, %s68, %s69
    %p73 = pneg %p67
    %p74 = scmp.eq.s32.totalorder %s9, 1
    %p75 = por %p73, %p74
    %p76 = scmp.ne.s32.totalorder %s68, %s71
    %p77 = scmp.eq.s32.totalorder %s9, 0
    %p78 = por %p76, %p77
    %p79 = scmp.ne.s32.totalorder %s68, %s71
    %p80 = scmp.eq.s32.totalorder %s14, 1
    %p81 = por %p79, %p80
    %p82 = scmp.ne.s32.totalorder %s71, %s72
    %p83 = scmp.eq.s32.totalorder %s14, 0
    %p84 = por %p82, %p83
    %p85 = scmp.ne.s32.totalorder %s71, %s72
    %p86 = scmp.eq.s32.totalorder %s15, 1
    %p87 = por %p85, %p86
    %p89 = scmp.ne.s32.totalorder %s72, %s88
    %p90 = scmp.eq.s32.totalorder %s15, 0
    %p91 = por %p89, %p90
    %s92 = ssub.s32 %s16, %s35
    %p93 = scmp.eq.s32.totalorder %s92, 0
    %s95 = sadd.s32 %s94, 1
    %s96 = scalar_select %p93, %s94, %s95
    %p99 = pneg %p93
    %p100 = scmp.eq.s32.totalorder %s9, 1
    %p101 = por %p99, %p100
    %p102 = scmp.ne.s32.totalorder %s94, %s97
    %p103 = scmp.eq.s32.totalorder %s9, 0
    %p104 = por %p102, %p103
    %p105 = scmp.ne.s32.totalorder %s94, %s97
    %p106 = scmp.eq.s32.totalorder %s14, 1
    %p107 = por %p105, %p106
    %p108 = scmp.ne.s32.totalorder %s97, %s98
    %p109 = scmp.eq.s32.totalorder %s14, 0
    %p110 = por %p108, %p109
    %p111 = scmp.ne.s32.totalorder %s97, %s98
    %p112 = scmp.eq.s32.totalorder %s15, 1
    %p113 = por %p111, %p112
    %p115 = scmp.ne.s32.totalorder %s98, %s114
    %p116 = scmp.eq.s32.totalorder %s15, 0
    %p117 = por %p115, %p116
    %s118 = ssub.s32 %s17, %s31
    %s119 = ssub.s32 %s16, %s35
    %s120 = sor.u32 %s118, %s119
    %s121 = ssub.s32 %s18, %s27
    %s122 = sor.u32 %s120, %s121
    %p123 = scmp.eq.s32.totalorder %s122, 0
    %s125 = sadd.s32 %s124, 1
    %s126 = scalar_select %p123, %s124, %s125
    %p129 = pneg %p123
    %p130 = scmp.eq.s32.totalorder %s9, 1
    %p131 = por %p129, %p130
    %p132 = scmp.ne.s32.totalorder %s124, %s127
    %p133 = scmp.eq.s32.totalorder %s9, 0
    %p134 = por %p132, %p133
    %p135 = scmp.ne.s32.totalorder %s124, %s127
    %p136 = scmp.eq.s32.totalorder %s14, 1
    %p137 = por %p135, %p136
    %p138 = scmp.ne.s32.totalorder %s127, %s128
    %p139 = scmp.eq.s32.totalorder %s14, 0
    %p140 = por %p138, %p139
    %p141 = scmp.ne.s32.totalorder %s127, %s128
    %p142 = scmp.eq.s32.totalorder %s15, 1
    %p143 = por %p141, %p142
    %p145 = scmp.ne.s32.totalorder %s128, %s144
    %p146 = scmp.eq.s32.totalorder %s15, 0
    %p147 = por %p145, %p146
    %p148 = scmp.le.s32.totalorder 1, %s9
    %p149 = scmp.lt.s32.totalorder %s9, 3
    %p150 = pnand %p148, %p149
    %p151 = pneg %p150
    // Predicated region
    $region9: #{gl_projector_forward.1} parent=5 // pred_check
      _
    $region10: #{gl_projector_forward.1} parent=5 // pred_check_branch
      %153 = sbr.rel (%p150) target = $region12
    $region11: #{gl_projector_forward.1} parent=5 // pred_region
      %s154 = ssub.s32 %s9, 1
      // Predicated region
      $region13: #{gl_projector_forward.1} parent=11 // pred_check
        %p155 = pneg %p84
      $region14: #{gl_projector_forward.1} parent=11 // pred_check_branch
        %157 = sbr.rel (%p155) target = $region16
      $region15: #{gl_projector_forward.1} parent=11 // pred_region
        %p158 = scmp.lt.s32.totalorder %s19, 0
        %s159 = scalar_select %p158, %s19, 0
        %s160 = smul.addr %s159, 8
        %s161 = smul.addr %s160, 8
        %s162 = scalar_lea.vmem %s1, %s161
      $region16: #{gl_projector_forward.1} parent=11 // pred_fallthru
        _
      // Predicated region
      $region17: #{gl_projector_forward.1} parent=11 // pred_check
        %p163 = pneg %p110
      $region18: #{gl_projector_forward.1} parent=11 // pred_check_branch
        %165 = sbr.rel (%p163) target = $region20
      $region19: #{gl_projector_forward.1} parent=11 // pred_region
        %p166 = scmp.lt.s32.totalorder %s19, 0
        %s167 = scalar_select %p166, %s19, 0
        %s168 = smul.addr %s167, 8
        %s169 = smul.addr %s168, 8
        %s170 = scalar_lea.vmem %s2, %s169
      $region20: #{gl_projector_forward.1} parent=11 // pred_fallthru
        _
    $region12: #{gl_projector_forward.1} parent=5 // pred_fallthru
      _
    %p171 = scmp.lt.s32.totalorder %s9, 2
    // Predicated region
    $region21: #{gl_projector_forward.1} parent=5 // pred_check
      %p172 = pneg %p171
    $region22: #{gl_projector_forward.1} parent=5 // pred_check_branch
      %174 = sbr.rel (%p172) target = $region24
    $region23: #{gl_projector_forward.1} parent=5 // pred_region
      // Predicated region
      $region25: #{gl_projector_forward.1} parent=23 // pred_check
        %p175 = pneg %p52
      $region26: #{gl_projector_forward.1} parent=23 // pred_check_branch
        %177 = sbr.rel (%p175) target = $region28
      $region27: #{gl_projector_forward.1} parent=23 // pred_region
        %s178 = smul.u32 2, %s18
        %p179 = scmp.lt.s32.totalorder %s17, 1
        %s180 = scalar_select %p179, %s17, 1
        %p181 = scmp.lt.s32.totalorder %s16, 0
        %s182 = scalar_select %p181, %s16, 0
        %p183 = scmp.lt.s32.totalorder %s178, 1
        %s184 = scalar_select %p183, %s178, 1
        %s185 = smul.addr %s182, 8
        %s186 = sadd.s32 %s184, %s185
        %s187 = smul.addr %s180, 8
        %s188 = sadd.s32 %s186, %s187
        %s189 = smul.addr %s188, 8
        %s190 = scalar_lea.vmem %s0, %s189
        %s191 = smul.u32 2, %s18
      $region28: #{gl_projector_forward.1} parent=23 // pred_fallthru
        _
    $region24: #{gl_projector_forward.1} parent=5 // pred_fallthru
      _
    %p192 = scmp.le.s32.totalorder 1, %s9
    %p193 = scmp.lt.s32.totalorder %s9, 3
    %p194 = pnand %p192, %p193
    %p195 = pneg %p194
    // Predicated region
    $region29: #{gl_projector_forward.1} parent=5 // pred_check
      _
    $region30: #{gl_projector_forward.1} parent=5 // pred_check_branch
      %197 = sbr.rel (%p194) target = $region32
    $region31: #{gl_projector_forward.1} parent=5 // pred_region
      %s198 = ssub.s32 %s9, 1
      %s199 = smul.u32 2, %s21
      %p200 = scmp.lt.s32.totalorder %s20, 1
      %s201 = scalar_select %p200, %s20, 1
      %p202 = scmp.lt.s32.totalorder %s19, 0
      %s203 = scalar_select %p202, %s19, 0
      %p204 = scmp.lt.s32.totalorder %s199, 1
      %s205 = scalar_select %p204, %s199, 1
      %s206 = smul.addr %s203, 8
      %s207 = sadd.s32 %s205, %s206
      %s208 = smul.addr %s201, 8
      %s209 = sadd.s32 %s207, %s208
      %s210 = smul.addr %s209, 8
      %s211 = scalar_lea.vmem %s0, %s210
      %p212 = pneg %p58
      %p213 = pneg %p55
      %p214 = scmp.lt.s32.totalorder %s19, 0
      %s215 = scalar_select %p214, %s19, 0
      %s216 = smul.addr %s215, 8
      %s217 = smul.addr %s216, 8
      %s218 = scalar_lea.vmem %s1, %s217
      %p219 = pneg %p84
      %p220 = pneg %p81
      %p221 = scmp.lt.s32.totalorder %s19, 0
      %s222 = scalar_select %p221, %s19, 0
      %s223 = smul.addr %s222, 8
      %s224 = smul.addr %s223, 8
      %s225 = scalar_lea.vmem %s2, %s224
      %p226 = pneg %p110
      %p227 = pneg %p107
      %p228 = pneg %p140
      %p229 = pneg %p137
      %s230 = smul.u32 2, %s21
      %p231 = scmp.lt.s32.totalorder %s20, 1
      %s232 = scalar_select %p231, %s20, 1
      %p233 = scmp.lt.s32.totalorder %s19, 0
      %s234 = scalar_select %p233, %s19, 0
      %p235 = scmp.lt.s32.totalorder %s230, 1
      %s236 = scalar_select %p235, %s230, 1
      %s237 = smul.addr %s234, 16
      %s238 = sadd.s32 %s236, %s237
      %s239 = smul.addr %s232, 16
      %s240 = sadd.s32 %s238, %s239
      %s241 = smul.addr %s240, 8
      %s242 = scalar_lea.vmem %s3, %s241
      %s243 = smul.u32 2, %s21
      %p244 = scmp.lt.s32.totalorder %s20, 1
      %s245 = scalar_select %p244, %s20, 1
      %p246 = scmp.lt.s32.totalorder %s19, 0
      %s247 = scalar_select %p246, %s19, 0
      %p248 = scmp.lt.s32.totalorder %s243, 1
      %s249 = scalar_select %p248, %s243, 1
      %s250 = smul.addr %s247, 8
      %s251 = sadd.s32 %s249, %s250
      %s252 = smul.addr %s245, 8
      %s253 = sadd.s32 %s251, %s252
      %s254 = smul.addr %s253, 8
      %s255 = scalar_lea.vmem %s0, %s254
      %s256 = smul.u32 2, %s21
      %p257 = scmp.lt.s32.totalorder %s19, 0
      %s258 = scalar_select %p257, %s19, 0
      %s259 = smul.addr %s258, 8
      %s260 = smul.addr %s259, 8
      %s261 = scalar_lea.vmem %s1, %s260
      %p262 = scmp.lt.s32.totalorder %s19, 0
      %s263 = scalar_select %p262, %s19, 0
      %s264 = smul.addr %s263, 8
      %s265 = smul.addr %s264, 8
      %s266 = scalar_lea.vmem %s2, %s265
      %s267 = smul.u32 2, %s21
      %p268 = scmp.lt.s32.totalorder %s20, 1
      %s269 = scalar_select %p268, %s20, 1
      %p270 = scmp.lt.s32.totalorder %s19, 0
      %s271 = scalar_select %p270, %s19, 0
      %p272 = scmp.lt.s32.totalorder %s267, 1
      %s273 = scalar_select %p272, %s267, 1
      %s274 = smul.addr %s271, 16
      %s275 = sadd.s32 %s273, %s274
      %s276 = smul.addr %s269, 16
      %s277 = sadd.s32 %s275, %s276
      %s278 = smul.addr %s277, 8
      %s279 = scalar_lea.vmem %s3, %s278
      %s280 = smul.u32 2, %s21
      %v281 = vld [vmem:[%s261] sm:$0xff]
      %v282 = vld [vmem:[%s261 + $0x8] sm:$0xff]
      %v283 = vld [vmem:[%s261 + $0x10] sm:$0xff]
      %v284 = vld [vmem:[%s261 + $0x18] sm:$0xff]
      %v285 = vld [vmem:[%s261 + $0x20] sm:$0xff]
      %v286 = vld [vmem:[%s261 + $0x28] sm:$0xff]
      %v287 = vld [vmem:[%s261 + $0x30] sm:$0xff]
      %v288 = vld [vmem:[%s261 + $0x38] sm:$0xff]
      %v289 = vld [vmem:[%s255] sm:$0xff]
      %v290 = vld [vmem:[%s255 + $0x8] sm:$0xff]
      %v291 = vld [vmem:[%s255 + $0x10] sm:$0xff]
      %v292 = vld [vmem:[%s255 + $0x18] sm:$0xff]
      %v293 = vld [vmem:[%s255 + $0x20] sm:$0xff]
      %v294 = vld [vmem:[%s255 + $0x28] sm:$0xff]
      %v295 = vld [vmem:[%s255 + $0x30] sm:$0xff]
      %v296 = vld [vmem:[%s255 + $0x38] sm:$0xff]
      %v297 = vld [vmem:[%s266] sm:$0xff]
      %v298 = vld [vmem:[%s266 + $0x8] sm:$0xff]
      %v299 = vld [vmem:[%s266 + $0x10] sm:$0xff]
      %v300 = vld [vmem:[%s266 + $0x18] sm:$0xff]
      %v301 = vld [vmem:[%s266 + $0x20] sm:$0xff]
      %v302 = vld [vmem:[%s266 + $0x28] sm:$0xff]
      %v303 = vld [vmem:[%s266 + $0x30] sm:$0xff]
      %v304 = vld [vmem:[%s266 + $0x38] sm:$0xff]
      %306 = vset.pattern.permute.xlu0 0
      %307 = vperm.xlu0 %306, %v297
      %v308 = vpop.permute.xlu0 %307
      %311 = vset.pattern.permute.xlu0 0
      %312 = vperm.xlu0 %311, %v298
      %v313 = vpop.permute.xlu0 %312
      %316 = vset.pattern.permute.xlu0 0
      %317 = vperm.xlu0 %316, %v299
      %v318 = vpop.permute.xlu0 %317
      %321 = vset.pattern.permute.xlu0 0
      %322 = vperm.xlu0 %321, %v300
      %v323 = vpop.permute.xlu0 %322
      %326 = vset.pattern.permute.xlu0 0
      %327 = vperm.xlu0 %326, %v301
      %v328 = vpop.permute.xlu0 %327
      %331 = vset.pattern.permute.xlu0 0
      %332 = vperm.xlu0 %331, %v302
      %v333 = vpop.permute.xlu0 %332
      %336 = vset.pattern.permute.xlu0 0
      %337 = vperm.xlu0 %336, %v303
      %v338 = vpop.permute.xlu0 %337
      %341 = vset.pattern.permute.xlu0 0
      %342 = vperm.xlu0 %341, %v304
      %v343 = vpop.permute.xlu0 %342
      %vm345 = vcmask 261120
      %v347 = vsel %vm345, %v281, 0
      %v350 = vsel %vm345, %v282, 0
      %v353 = vsel %vm345, %v283, 0
      %v356 = vsel %vm345, %v284, 0
      %v359 = vsel %vm345, %v285, 0
      %v362 = vsel %vm345, %v286, 0
      %v365 = vsel %vm345, %v287, 0
      %v368 = vsel %vm345, %v288, 0
      %370 = vmatpush.msra.mxu0 0.0
      %371 = vmatpush.msra.mxu0 0.0
      %372 = vmatpush.msra.mxu0 0.0
      %373 = vmatpush.msra.mxu0 0.0
      %374 = vmatpush.msra.mxu0 0.0
      %375 = vmatpush.msra.mxu0 0.0
      %376 = vmatpush.msra.mxu0 0.0
      %377 = vmatpush.msra.mxu0 0.0
      %378 = vmatpush.msra.mxu0 0.0
      %379 = vmatpush.msra.mxu0 0.0
      %380 = vmatpush.msra.mxu0 0.0
      %381 = vmatpush.msra.mxu0 0.0
      %382 = vmatpush.msra.mxu0 %v295
      %383 = vmatpush.msra.mxu0 %v293
      %384 = vmatpush.msra.mxu0 %v291
      %385 = vmatpush.msra.mxu0 %v289
      %386 = vmatmul.f32.gmra.mxu0 %v347
      %v387 = vpop.f32.mrf.mxu0
      %v388 = vadd.f32 %v308, %v387
      %389 = vmatmul.f32.gmra.mxu0 %v350
      %v390 = vpop.f32.mrf.mxu0
      %v391 = vadd.f32 %v313, %v390
      %392 = vmatmul.f32.gmra.mxu0 %v353
      %v393 = vpop.f32.mrf.mxu0
      %v394 = vadd.f32 %v318, %v393
      %395 = vmatmul.f32.gmra.mxu0 %v356
      %v396 = vpop.f32.mrf.mxu0
      %v397 = vadd.f32 %v323, %v396
      %398 = vmatmul.f32.gmra.mxu0 %v359
      %v399 = vpop.f32.mrf.mxu0
      %v400 = vadd.f32 %v328, %v399
      %401 = vmatmul.f32.gmra.mxu0 %v362
      %v402 = vpop.f32.mrf.mxu0
      %v403 = vadd.f32 %v333, %v402
      %404 = vmatmul.f32.gmra.mxu0 %v365
      %v405 = vpop.f32.mrf.mxu0
      %v406 = vadd.f32 %v338, %v405
      %407 = vmatmul.f32.gmra.mxu0 %v368
      %v408 = vpop.f32.mrf.mxu0
      %v409 = vadd.f32 %v343, %v408
      %410 = vdwg.mxu0
      %411 = vmatpush.msra.mxu0 0.0
      %412 = vmatpush.msra.mxu0 0.0
      %413 = vmatpush.msra.mxu0 0.0
      %414 = vmatpush.msra.mxu0 0.0
      %415 = vmatpush.msra.mxu0 0.0
      %416 = vmatpush.msra.mxu0 0.0
      %417 = vmatpush.msra.mxu0 0.0
      %418 = vmatpush.msra.mxu0 0.0
      %419 = vmatpush.msra.mxu0 0.0
      %420 = vmatpush.msra.mxu0 0.0
      %421 = vmatpush.msra.mxu0 0.0
      %422 = vmatpush.msra.mxu0 0.0
      %423 = vmatpush.msra.mxu0 %v296
      %424 = vmatpush.msra.mxu0 %v294
      %425 = vmatpush.msra.mxu0 %v292
      %426 = vmatpush.msra.mxu0 %v290
      %427 = vmatmul.f32.gmra.mxu0 %v347
      %v428 = vpop.f32.mrf.mxu0
      %v429 = vadd.f32 %v308, %v428
      %430 = vmatmul.f32.gmra.mxu0 %v350
      %v431 = vpop.f32.mrf.mxu0
      %v432 = vadd.f32 %v313, %v431
      %433 = vmatmul.f32.gmra.mxu0 %v353
      %v434 = vpop.f32.mrf.mxu0
      %v435 = vadd.f32 %v318, %v434
      %436 = vmatmul.f32.gmra.mxu0 %v356
      %v437 = vpop.f32.mrf.mxu0
      %v438 = vadd.f32 %v323, %v437
      %439 = vmatmul.f32.gmra.mxu0 %v359
      %v440 = vpop.f32.mrf.mxu0
      %v441 = vadd.f32 %v328, %v440
      %442 = vmatmul.f32.gmra.mxu0 %v362
      %v443 = vpop.f32.mrf.mxu0
      %v444 = vadd.f32 %v333, %v443
      %445 = vmatmul.f32.gmra.mxu0 %v365
      %v446 = vpop.f32.mrf.mxu0
      %v447 = vadd.f32 %v338, %v446
      %448 = vmatmul.f32.gmra.mxu0 %v368
      %v449 = vpop.f32.mrf.mxu0
      %v450 = vadd.f32 %v343, %v449
      %451 = vdwg.mxu0
      %452 = vst [vmem:[%s279] sm:$0xff] %v388
      %453 = vst [vmem:[%s279 + $0x8] sm:$0xff] %v429
      %454 = vst [vmem:[%s279 + $0x10] sm:$0xff] %v391
      %455 = vst [vmem:[%s279 + $0x18] sm:$0xff] %v432
      %456 = vst [vmem:[%s279 + $0x20] sm:$0xff] %v394
      %457 = vst [vmem:[%s279 + $0x28] sm:$0xff] %v435
      %458 = vst [vmem:[%s279 + $0x30] sm:$0xff] %v397
      %459 = vst [vmem:[%s279 + $0x38] sm:$0xff] %v438
      %460 = vst [vmem:[%s279 + $0x40] sm:$0xff] %v400
      %461 = vst [vmem:[%s279 + $0x48] sm:$0xff] %v441
      %462 = vst [vmem:[%s279 + $0x50] sm:$0xff] %v403
      %463 = vst [vmem:[%s279 + $0x58] sm:$0xff] %v444
      %464 = vst [vmem:[%s279 + $0x60] sm:$0xff] %v406
      %465 = vst [vmem:[%s279 + $0x68] sm:$0xff] %v447
      %466 = vst [vmem:[%s279 + $0x70] sm:$0xff] %v409
      %467 = vst [vmem:[%s279 + $0x78] sm:$0xff] %v450
      %s468 = smul.u32 2, %s21
      %p469 = scmp.lt.s32.totalorder %s20, 1
      %s470 = scalar_select %p469, %s20, 1
      %p471 = scmp.lt.s32.totalorder %s19, 0
      %s472 = scalar_select %p471, %s19, 0
      %p473 = scmp.lt.s32.totalorder %s468, 1
      %s474 = scalar_select %p473, %s468, 1
      %s475 = smul.addr %s472, 16
      %s476 = sadd.s32 %s474, %s475
      %s477 = smul.addr %s470, 16
      %s478 = sadd.s32 %s476, %s477
      %s479 = smul.addr %s478, 8
      %s480 = scalar_lea.vmem %s3, %s479
      // Predicated region
      $region33: #{gl_projector_forward.1} parent=31 // pred_check
        %p481 = pneg %p137
      $region34: #{gl_projector_forward.1} parent=31 // pred_check_branch
        %483 = sbr.rel (%p481) target = $region36
      $region35: #{gl_projector_forward.1} parent=31 // pred_region
        %s484 = smul.u32 2, %s21
      $region36: #{gl_projector_forward.1} parent=31 // pred_fallthru
        _
    $region32: #{gl_projector_forward.1} parent=5 // pred_fallthru
      _
    %p485 = scmp.le.s32.totalorder 2, %s9
    // Predicated region
    $region37: #{gl_projector_forward.1} parent=5 // pred_check
      %p486 = pneg %p485
    $region38: #{gl_projector_forward.1} parent=5 // pred_check_branch
      %488 = sbr.rel (%p486) target = $region40
    $region39: #{gl_projector_forward.1} parent=5 // pred_region
      %s489 = ssub.s32 %s9, 2
      // Predicated region
      $region41: #{gl_projector_forward.1} parent=39 // pred_check
        %p490 = pneg %p143
      $region42: #{gl_projector_forward.1} parent=39 // pred_check_branch
        %492 = sbr.rel (%p490) target = $region44
      $region43: #{gl_projector_forward.1} parent=39 // pred_region
        %s493 = smul.u32 2, %s24
        %p494 = scmp.lt.s32.totalorder %s23, 1
        %s495 = scalar_select %p494, %s23, 1
        %p496 = scmp.lt.s32.totalorder %s22, 0
        %s497 = scalar_select %p496, %s22, 0
        %p498 = scmp.lt.s32.totalorder %s493, 1
        %s499 = scalar_select %p498, %s493, 1
        %s500 = smul.addr %s497, 16
        %s501 = sadd.s32 %s499, %s500
        %s502 = smul.addr %s495, 16
        %s503 = sadd.s32 %s501, %s502
        %s504 = smul.addr %s503, 8
        %s505 = scalar_lea.vmem %s3, %s504
      $region44: #{gl_projector_forward.1} parent=39 // pred_fallthru
        _
    $region40: #{gl_projector_forward.1} parent=5 // pred_fallthru
      _
  $region6: #{gl_projector_forward.1} parent=0 // loop_footer
    %s13 = sadd.s32 1, %s9
  $region7: #{gl_projector_forward.1} parent=0 // loop_footer_branch
    %8 = sbr.rel target = $region3
  $region8: #{gl_projector_forward.1} parent=0 // loop_exit
    _

</llo_original>
